<compile_context>
chip_gen: v7x
topology: tpu7x:2x2x1
jax: 0.10.0
libtpu: 0.0.40
codegen_flags: <defaults>
</compile_context>

<pallas_src>
import math

import jax
import jax.numpy as jnp
from jax.experimental import pallas as pl
from jax.experimental.pallas import tpu as pltpu


def _bilinear_kernel(b_ref, u_ref, d_ref, o_ref):
    # b_ref: [1]        bias (SMEM scalar)
    # u_ref: [1, D]     precomputed q^T W (resident; fetched once)
    # d_ref: [TILE_N, D] doc tile (streamed, double-buffered by Pallas)
    # o_ref: [1, TILE_N] lane-dense scores tile
    d = d_ref[...]
    if d.dtype != u_ref.dtype:        # static (trace-time) branch
        d = d.astype(u_ref.dtype)
    s = jax.lax.dot_general(
        u_ref[...], d,
        dimension_numbers=(((1,), (1,)), ((), ())),   # contract D of both -> [1, TILE_N]
        preferred_element_type=jnp.float32)
    o_ref[...] = s + b_ref[0]


def _round_up(x: int, m: int) -> int:
    return (x + m - 1) // m * m


def bilinear_similarity(query_emb: jax.Array,
                        doc_embs: jax.Array,
                        weight: jax.Array,
                        bias: jax.Array) -> jax.Array:
    """
    query_emb: [D]
    doc_embs : [N, D]
    weight   : [1, D, D] (nn.Bilinear weight)
    bias     : [1]       (nn.Bilinear bias)
    returns  : [N] f32 similarity scores
    """
    n, d = doc_embs.shape
    itemsize = doc_embs.dtype.itemsize

    # --- hoisted q^T W (once, outside the kernel); W read in its stored dtype ---
    w2 = weight.reshape(d, d)
    q = query_emb.reshape(1, d).astype(w2.dtype)
    u = jnp.dot(q, w2, preferred_element_type=jnp.float32)        # [1, D] f32
    b = bias.reshape(1).astype(jnp.float32)

    doc_dt = doc_embs.dtype
    if jnp.issubdtype(doc_dt, jnp.floating) and doc_dt != jnp.float32 and doc_dt.itemsize >= 2:
        # bf16/f16 docs: matched-dtype MXU matmul, f32 accumulate (u kept >= bf16).
        u_k = u.astype(doc_dt)
    else:
        # f32 docs (or exotic narrow/int docs): keep u in f32; kernel up-casts the
        # doc tile at trace time if dtypes differ.
        u_k = u

    # --- generation-aware VMEM budget ---
    try:
        info = pltpu.get_tpu_info()
        vmem_phys = int(getattr(info, "vmem_capacity_bytes", 64 * 1024 * 1024))
    except Exception:
        vmem_phys = 64 * 1024 * 1024              # conservative: assume v7x
    if vmem_phys >= 100 * 1024 * 1024:            # v5e / v6e (128 MiB VMEM)
        per_buf_budget = 24 * 1024 * 1024
        vmem_limit = 96 * 1024 * 1024
    else:                                         # v7x (64 MiB VMEM per TC)
        per_buf_budget = 12 * 1024 * 1024
        vmem_limit = 40 * 1024 * 1024

    # --- doc tile sizing from a byte target (lane-padded per-row footprint) ---
    row_bytes = _round_up(d, 128) * itemsize
    tile_n = max(128, (per_buf_budget // row_bytes) // 128 * 128)
    tile_n = min(tile_n, _round_up(n, 128))
    # TODO(synk): add a D-tiling fallback (K grid axis + f32 VMEM accumulator,
    # reduction axis last / "arbitrary") for huge D where even a (128, D) block
    # exceeds the per-buffer budget.
    vmem_limit = max(vmem_limit,
                     min(2 * tile_n * row_bytes + 4 * 1024 * 1024,
                         vmem_phys - 16 * 1024 * 1024))

    # --- non-divisible grid: docs are NOT padded/copied; only the output
    #     (N floats) is allocated rounded up, and the tail is sliced off ---
    n_tiles = pl.cdiv(n, tile_n)
    n_pad = n_tiles * tile_n

    cost = pl.CostEstimate(
        flops=2 * n * d,
        transcendentals=0,
        bytes_accessed=n * d * itemsize + d * u_k.dtype.itemsize + n_pad * 4)

    out = pl.pallas_call(
        _bilinear_kernel,
        out_shape=jax.ShapeDtypeStruct((1, n_pad), jnp.float32),
        grid_spec=pltpu.PrefetchScalarGridSpec(
            num_scalar_prefetch=0,
            grid=(n_tiles,),
            in_specs=[
                pl.BlockSpec(memory_space=pltpu.SMEM),            # bias [1] scalar
                pl.BlockSpec((1, d), lambda i: (0, 0)),           # u    [1, D] (resident)
                pl.BlockSpec((tile_n, d), lambda i: (i, 0)),      # docs tile (streamed)
            ],
            out_specs=pl.BlockSpec((1, tile_n), lambda i: (0, i)),  # lane-dense scores
        ),
        compiler_params=pltpu.CompilerParams(
            # Independent doc tiles; on v7x the two TensorCores can split this
            # axis (if profiling shows a single TC streaming, switch to
            # pltpu.CORE_PARALLEL / explicit core_map).
            dimension_semantics=("parallel",),
            vmem_limit_bytes=int(vmem_limit),
        ),
        cost_estimate=cost,
    )(b, u_k, doc_embs)
    return out[0, :n]


def init_params(embedding_dim: int, key: jax.Array):
    """Deterministic init matching the PyTorch module's __init__.

    nn.Bilinear(D, D, 1) weight shape = [1, D, D], bias shape = [1].
    xavier_uniform_: fan_in = D*D, fan_out = D, bound = sqrt(6/(fan_in+fan_out)).
    bias zero-initialized.
    """
    d = embedding_dim
    fan_in = d * d
    fan_out = 1 * d
    bound = math.sqrt(6.0 / (fan_in + fan_out))
    weight = jax.random.uniform(key, (1, d, d), jnp.float32, -bound, bound)
    bias = jnp.zeros((1,), jnp.float32)
    return weight, bias


if __name__ == "__main__":
    D = 32       # embedding_dim
    N = 8        # num_docs

    key = jax.random.PRNGKey(0)
    k_w, k_q, k_d = jax.random.split(key, 3)

    weight, bias = init_params(D, k_w)
    query_emb = jax.random.normal(k_q, (D,), jnp.float32)
    doc_embs = jax.random.normal(k_d, (N, D), jnp.float32)

    scores = bilinear_similarity(query_emb, doc_embs, weight, bias)
    scores = jax.block_until_ready(scores)

    # Reference check in plain JAX (same math as nn.Bilinear).
    ref = jnp.einsum("i,ij,nj->n", query_emb, weight[0], doc_embs) + bias[0]
    assert scores.shape == (N,)
    assert jnp.allclose(scores, ref, atol=1e-4, rtol=1e-4), (scores, ref)

    print("KERNEL_OK")
</pallas_src>

<mosaic_0001>
module attributes {stable_mosaic.version = 11 : i64} {
  func.func @_bilinear_kernel(%arg0: i32, %arg1: memref<1xf32, #tpu.memory_space<smem>>, %arg2: memref<1x32xf32, #tpu.memory_space<vmem>>, %arg3: memref<128x32xf32, #tpu.memory_space<vmem>>, %arg4: memref<1x128xf32, #tpu.memory_space<vmem>>) attributes {dimension_semantics = [#tpu.dimension_semantics<parallel>], iteration_bounds = array<i64: 1>, scalar_prefetch = 0 : i64, scratch_operands = 0 : i64, tpu.core_type = #tpu.core_type<tc>, window_params = [{transform_indices = @transform_0, window_bounds = array<i64: 1>}, {pipeline_mode = #tpu.pipeline_mode<synchronous>, transform_indices = @transform_1, window_bounds = array<i64: 1, 32>}, {transform_indices = @transform_2, window_bounds = array<i64: 128, 32>}, {transform_indices = @transform_3, window_bounds = array<i64: 1, 128>}]} {
    %c0 = arith.constant 0 : index
    %c0_0 = arith.constant 0 : index
    %0 = vector.load %arg3[%c0, %c0_0] : memref<128x32xf32, #tpu.memory_space<vmem>>, vector<128x32xf32>
    %c0_1 = arith.constant 0 : index
    %c0_2 = arith.constant 0 : index
    %1 = vector.load %arg2[%c0_1, %c0_2] : memref<1x32xf32, #tpu.memory_space<vmem>>, vector<1x32xf32>
    %cst = arith.constant dense<0.000000e+00> : vector<1x128xf32>
    %2 = tpu.matmul %1, %0, %cst {dimension_numbers = #tpu.dot_dimension_numbers<[1], [1], [0], [0], [0, 0, 1, 0], [], []>} : vector<1x32xf32>, vector<128x32xf32>, vector<1x128xf32> -> vector<1x128xf32>
    %c0_3 = arith.constant 0 : index
    %3 = memref.load %arg1[%c0_3] : memref<1xf32, #tpu.memory_space<smem>>
    %4 = vector.broadcast %3 : f32 to vector<1x128xf32>
    %5 = arith.addf %2, %4 : vector<1x128xf32>
    %c0_4 = arith.constant 0 : index
    %c0_5 = arith.constant 0 : index
    %6 = vector.load %arg4[%c0_4, %c0_5] : memref<1x128xf32, #tpu.memory_space<vmem>>, vector<1x128xf32>
    tpu.vector_store %arg4[%c0_4, %c0_5], %5 {strides = array<i32>} : memref<1x128xf32, #tpu.memory_space<vmem>>, vector<1x128xf32>,
    return
  }
  func.func @transform_0(%arg0: i32) -> i32 {
    %c0_i32 = arith.constant 0 : i32
    %c0_i32_0 = arith.constant 0 : i32
    return %c0_i32 : i32
  }
  func.func @transform_1(%arg0: i32) -> (i32, i32) {
    %c0_i32 = arith.constant 0 : i32
    %c0_i32_0 = arith.constant 0 : i32
    %c0_i32_1 = arith.constant 0 : i32
    return %c0_i32, %c0_i32_0 : i32, i32
  }
  func.func @transform_2(%arg0: i32) -> (i32, i32) {
    %c0_i32 = arith.constant 0 : i32
    %c0_i32_0 = arith.constant 0 : i32
    return %arg0, %c0_i32 : i32, i32
  }
  func.func @transform_3(%arg0: i32) -> (i32, i32) {
    %c0_i32 = arith.constant 0 : i32
    %c0_i32_0 = arith.constant 0 : i32
    return %c0_i32, %arg0 : i32, i32
  }
}

</mosaic_0001>

<llo_original>
// kernel: tpu_custom_call.1
$region0: #{tpu_custom_call.1}
  #allocation0 [shape = 'u32[]', space=smem, size = 0x4, offset = 0x4, fixed_abs, tag = 'smem constant byte address 0x4 - core index']
  #allocation1 [shape = 'u32[144,128]{1,0:T(1,128)}', space=vmem, size = 0x12000, scoped, tag = 'internal scratch']
  #allocation2 [shape = 'f32[1]{0:T(128)S(6)}', space=smem, size = 0x200, scoped, tag = 'scoped memory for tpu_custom_call.1']
  %s0 = inlined_call_operand.<no memory space> [shape: f32[1], index: 0, kind: input, shape index: {}]
  %s1 = inlined_call_operand.vmem [shape: f32[1,32], index: 1, kind: input, shape index: {}]
  %s2 = inlined_call_operand.hbm [shape: f32[8,32], index: 2, kind: input, shape index: {}]
  %s3 = inlined_call_operand.hbm [shape: f32[1,128], index: 3, kind: output, shape index: {}]
  %s4 = sld [smem:[#allocation0]]
  $region26: #{tpu_custom_call.1} parent=0
    _
  %s6 = ssub.s32 1, %s4
  %s7 = scalar_select 0, %s6, %s4
  %8 = sst [smem:[#allocation2]] %s0
  $region1: #{tpu_custom_call.1} parent=0
    #allocation3 [shape = 'u8[65536]{0}', space=vmem, size = 0x10000, scoped, tag = 'input window, operand 2, single buffered']
    #allocation4 [shape = 's32[1]{0}', space=sflag, size = 0x4, scoped, tag = 'scoped memory for tpu_custom_call.1']
    #allocation5 [shape = 's32[1]{0}', space=sflag, size = 0x4, scoped, tag = 'scoped memory for tpu_custom_call.1']
    #allocation6 [shape = 'u8[512]{0}', space=vmem, size = 0x400, scoped, tag = 'output window, operand 0, single buffered']
    %9 = vsyncpa [#allocation4], 0
    %10 = vsyncpa [#allocation5], 0
    // Predicated region
    $region2: #{tpu_custom_call.1} parent=1 // pred_check
      _
    $region3: #{tpu_custom_call.1} parent=1 // pred_check_branch
      %12 = sbr.rel (0) target = $region5
    $region4: #{tpu_custom_call.1} parent=1 // pred_region
      _
    $region5: #{tpu_custom_call.1} parent=1 // pred_fallthru
      _
    // Predicated region
    $region6: #{tpu_custom_call.1} parent=1 // pred_check
      _
    $region7: #{tpu_custom_call.1} parent=1 // pred_check_branch
      %14 = sbr.rel (0) target = $region9
    $region8: #{tpu_custom_call.1} parent=1 // pred_region
      _
    $region9: #{tpu_custom_call.1} parent=1 // pred_fallthru
      _
    // Predicated region
    $region10: #{tpu_custom_call.1} parent=1 // pred_check
      _
    $region11: #{tpu_custom_call.1} parent=1 // pred_check_branch
      %16 = sbr.rel (0) target = $region13
    $region12: #{tpu_custom_call.1} parent=1 // pred_region
      %s18 = ssub.s32 2048, 128
      %19 = vsyncadd [#allocation4], %s18
      %s20 = sshll.u32 [#allocation3], 4
      %s21 = int_to_ptr.vmem [resolvable:$true] %s20
      %26 = dma.hbm_to_vmem [thread:$0]  %s2, 128, %s21, [#allocation4], 128, 128, 8
    $region13: #{tpu_custom_call.1} parent=1 // pred_fallthru
      _
    // Predicated region
    $region14: #{tpu_custom_call.1} parent=1 // pred_check
      _
    $region15: #{tpu_custom_call.1} parent=1 // pred_check_branch
      %28 = sbr.rel (0) target = $region17
    $region16: #{tpu_custom_call.1} parent=1 // pred_region
      %29 = dma.done [#allocation4], 2048
    $region17: #{tpu_custom_call.1} parent=1 // pred_fallthru
      _
    %v30 = vld [vmem:[#allocation3] sm:$0xff]
    %v31 = vld [vmem:[#allocation3 + $0x8] sm:$0xff]
    %v32 = vld [vmem:[#allocation3 + $0x10] sm:$0xff]
    %v33 = vld [vmem:[#allocation3 + $0x18] sm:$0xff]
    %v34 = vld [vmem:[#allocation3 + $0x20] sm:$0xff]
    %v35 = vld [vmem:[#allocation3 + $0x28] sm:$0xff]
    %v36 = vld [vmem:[#allocation3 + $0x30] sm:$0xff]
    %v37 = vld [vmem:[#allocation3 + $0x38] sm:$0xff]
    %v38 = vld [vmem:[#allocation3 + $0x40] sm:$0xff]
    %v39 = vld [vmem:[#allocation3 + $0x48] sm:$0xff]
    %v40 = vld [vmem:[#allocation3 + $0x50] sm:$0xff]
    %v41 = vld [vmem:[#allocation3 + $0x58] sm:$0xff]
    %v42 = vld [vmem:[#allocation3 + $0x60] sm:$0xff]
    %v43 = vld [vmem:[#allocation3 + $0x68] sm:$0xff]
    %v44 = vld [vmem:[#allocation3 + $0x70] sm:$0xff]
    %v45 = vld [vmem:[#allocation3 + $0x78] sm:$0xff]
    %v46 = vld [vmem:[%s1] sm:$0x1]
    %s47 = sld [smem:[#allocation2]]
    %v48 = vstv %s47
    %vm49 = vcmask 261120
    %v51 = vsel %vm49, %v46, 0
    %v54 = vsel %vm49, %v30, 0
    %v57 = vsel %vm49, %v31, 0
    %v60 = vsel %vm49, %v32, 0
    %v63 = vsel %vm49, %v33, 0
    %v66 = vsel %vm49, %v34, 0
    %v69 = vsel %vm49, %v35, 0
    %v72 = vsel %vm49, %v36, 0
    %v75 = vsel %vm49, %v37, 0
    %v78 = vsel %vm49, %v38, 0
    %v81 = vsel %vm49, %v39, 0
    %v84 = vsel %vm49, %v40, 0
    %v87 = vsel %vm49, %v41, 0
    %v90 = vsel %vm49, %v42, 0
    %v93 = vsel %vm49, %v43, 0
    %v96 = vsel %vm49, %v44, 0
    %v99 = vsel %vm49, %v45, 0
    %101 = vmatprep.subr.mxu0 0.0
    %102 = vmatpush1.xpose.msra.mxu0 %v54
    %103 = vmatprep.subr.mxu0 0.0
    %104 = vmatpush1.xpose.msra.mxu0 %v57
    %105 = vmatprep.subr.mxu0 0.0
    %106 = vmatpush1.xpose.msra.mxu0 %v60
    %107 = vmatprep.subr.mxu0 0.0
    %108 = vmatpush1.xpose.msra.mxu0 %v63
    %109 = vmatprep.subr.mxu0 0.0
    %110 = vmatpush1.xpose.msra.mxu0 %v66
    %111 = vmatprep.subr.mxu0 0.0
    %112 = vmatpush1.xpose.msra.mxu0 %v69
    %113 = vmatprep.subr.mxu0 0.0
    %114 = vmatpush1.xpose.msra.mxu0 %v72
    %115 = vmatprep.subr.mxu0 0.0
    %116 = vmatpush1.xpose.msra.mxu0 %v75
    %117 = vmatprep.subr.mxu0 0.0
    %118 = vmatpush1.xpose.msra.mxu0 %v78
    %119 = vmatprep.subr.mxu0 0.0
    %120 = vmatpush1.xpose.msra.mxu0 %v81
    %121 = vmatprep.subr.mxu0 0.0
    %122 = vmatpush1.xpose.msra.mxu0 %v84
    %123 = vmatprep.subr.mxu0 0.0
    %124 = vmatpush1.xpose.msra.mxu0 %v87
    %125 = vmatprep.subr.mxu0 0.0
    %126 = vmatpush1.xpose.msra.mxu0 %v90
    %127 = vmatprep.subr.mxu0 0.0
    %128 = vmatpush1.xpose.msra.mxu0 %v93
    %129 = vmatprep.subr.mxu0 0.0
    %130 = vmatpush1.xpose.msra.mxu0 %v96
    %131 = vmatprep.subr.mxu0 0.0
    %132 = vmatpush1.xpose.msra.mxu0 %v99
    %133 = vmatprep.subr.mxu0 0.0
    %134 = vmatpush1.xpose.msra.mxu0 0.0
    %135 = vmatprep.subr.mxu0 0.0
    %136 = vmatpush1.xpose.msra.mxu0 0.0
    %137 = vmatprep.subr.mxu0 0.0
    %138 = vmatpush1.xpose.msra.mxu0 0.0
    %139 = vmatprep.subr.mxu0 0.0
    %140 = vmatpush1.xpose.msra.mxu0 0.0
    %141 = vmatprep.subr.mxu0 0.0
    %142 = vmatpush1.xpose.msra.mxu0 0.0
    %143 = vmatprep.subr.mxu0 0.0
    %144 = vmatpush1.xpose.msra.mxu0 0.0
    %145 = vmatprep.subr.mxu0 0.0
    %146 = vmatpush1.xpose.msra.mxu0 0.0
    %147 = vmatprep.subr.mxu0 0.0
    %148 = vmatpush1.xpose.msra.mxu0 0.0
    %149 = vmatprep.subr.mxu0 0.0
    %150 = vmatpush1.xpose.msra.mxu0 0.0
    %151 = vmatprep.subr.mxu0 0.0
    %152 = vmatpush1.xpose.msra.mxu0 0.0
    %153 = vmatprep.subr.mxu0 0.0
    %154 = vmatpush1.xpose.msra.mxu0 0.0
    %155 = vmatprep.subr.mxu0 0.0
    %156 = vmatpush1.xpose.msra.mxu0 0.0
    %157 = vmatprep.subr.mxu0 0.0
    %158 = vmatpush1.xpose.msra.mxu0 0.0
    %159 = vmatprep.subr.mxu0 0.0
    %160 = vmatpush1.xpose.msra.mxu0 0.0
    %161 = vmatprep.subr.mxu0 0.0
    %162 = vmatpush1.xpose.msra.mxu0 0.0
    %163 = vmatprep.subr.mxu0 0.0
    %164 = vmatpush1.xpose.msra.mxu0 0.0
    %165 = vmatprep.mubr.f32.mxu0 0.0
    %166 = vmatmul.mubr.f32.gmra.mrb[0].mxu0 %v51
    %v167 = vpop.f32.mrb[0].mxu0
    %v168 = vadd.f32 %v48, %v167
    %v169 = vpop.f32.mrb[0].mxu0
    %170 = vdwg.mxu0
    %171 = vst [vmem:[#allocation6] sm:$0x1] %v168
    // Predicated region
    $region18: #{tpu_custom_call.1} parent=1 // pred_check
      _
    $region19: #{tpu_custom_call.1} parent=1 // pred_check_branch
      %173 = sbr.rel (0) target = $region21
    $region20: #{tpu_custom_call.1} parent=1 // pred_region
      %s175 = ssub.s32 16, 16
      %176 = vsyncadd [#allocation5], %s175
      %s178 = sshll.u32 [#allocation6], 4
      %s179 = int_to_ptr.vmem [resolvable:$true] %s178
      %181 = dma.vmem_to_hbm [thread:$0]  %s179, 16, %s3, [#allocation5]
    $region21: #{tpu_custom_call.1} parent=1 // pred_fallthru
      _
    // Predicated region
    $region22: #{tpu_custom_call.1} parent=1 // pred_check
      _
    $region23: #{tpu_custom_call.1} parent=1 // pred_check_branch
      %183 = sbr.rel (0) target = $region25
    $region24: #{tpu_custom_call.1} parent=1 // pred_region
      %184 = dma.done [#allocation5], 16
    $region25: #{tpu_custom_call.1} parent=1 // pred_fallthru
      _
    %185 = vsyncpa [#allocation4], 1
    %186 = vsyncpa [#allocation5], 1

</llo_original>
